<compile_context>
chip_gen: v6e
topology: v6e:2x2x1
jax: 0.10.0
libtpu: 0.0.40
codegen_flags: <defaults>
</compile_context>

<pallas_src>
import functools

import jax
import jax.numpy as jnp
from jax.experimental import pallas as pl
from jax.experimental.pallas import tpu as pltpu

HP = 128          # hidden dim padded to one full 128-lane vreg width
OUT_LANES = 128   # output head padded so the final store is an unmasked vst


def temporal_gnn_kernel(a_ref, x_ref, wbd_ref, bias_ref, head_ref, o_ref):
    ph = wbd_ref.shape[2]                        # P*H (static)

    # Graph conv applied once to ALL periods' stacked features: (tm, P*F).
    ax = jnp.dot(a_ref[...], x_ref[...], preferred_element_type=jnp.float32)

    # Two lane-aligned gate matmuls; the leading gate axis of wbd keeps each
    # result lane-aligned regardless of whether P*H is a multiple of 128.
    pre_z = (jnp.dot(ax, wbd_ref[0], preferred_element_type=jnp.float32)
             + bias_ref[:, :ph])
    pre_h = (jnp.dot(ax, wbd_ref[1], preferred_element_type=jnp.float32)
             + bias_ref[:, ph:2 * ph])
    z = jax.nn.sigmoid(pre_z)                    # (tm, P*H)
    h_tilde = jnp.tanh(pre_h)                    # (tm, P*H)
    h_all = (1.0 - z) * h_tilde                  # H_prev = 0 -> H_t = (1-z)*h~

    # Attention-weighted period sum as a matmul with kron(probs, I_H), padded
    # to HP output lanes so every later intermediate is a full-lane vreg.
    h = jnp.dot(h_all, head_ref[:ph, :], preferred_element_type=jnp.float32)

    # MLP head.  Dropout(p=0.5) is the identity in eval/inference mode.
    h = jnp.maximum(h, 0.0)                                              # ReLU
    h = (jnp.dot(h, head_ref[ph:ph + HP, :],
                 preferred_element_type=jnp.float32)
         + bias_ref[:, 2 * ph:2 * ph + HP])                              # linear1
    h = jnp.maximum(h, 0.0)                                              # ReLU
    o_ref[...] = (jnp.dot(h, head_ref[ph + HP:, :],
                          preferred_element_type=jnp.float32)
                  + bias_ref[:, 2 * ph + HP:])                           # out (padded)


def prepare_params(params, node_features, periods, hidden):
    """One-time weight preparation (hoisted out of the per-call path).

    Returns 3 packed device arrays:
      wbd : (2, P*F, P*H)        block-diag gate weights (z gate, then h gate)
      bias: (1, 2*P*H + HP + 128) [bz-tile | bh-tile | b1(pad HP) | bo(pad 128)]
      head: (P*H + 2*HP, 128)    [pmat(pad) ; w1(pad) ; wo(pad)]
    """
    F, P, H = node_features, periods, hidden
    assert H <= HP and P <= OUT_LANES

    probs = jax.nn.softmax(params["attention"].astype(jnp.float32))      # (P,)

    # Exact reassociations:  A@(xW)+b == (A@x)@W+b  and
    # ((A@x)@W + b)@L + bl == (A@x)@(W@L) + (b@L + bl).
    wz_f = params["wz"] @ params["lz"]                                   # (F, H)
    bz_f = params["bz"] @ params["lz"] + params["blz"]                   # (1, H)
    wh_f = params["wh"] @ params["lh"]                                   # (F, H)
    bh_f = params["bh"] @ params["lh"] + params["blh"]                   # (1, H)

    # Block-diagonal over periods; one lane-dense matmul per gate covers all P.
    eye_p = jnp.eye(P, dtype=jnp.float32)
    wbd = jnp.stack([jnp.kron(eye_p, wz_f),
                     jnp.kron(eye_p, wh_f)], axis=0)                     # (2, P*F, P*H)

    # Attention-weighted period sum as a matmul, padded to HP output lanes.
    pmat = jnp.kron(probs[:, None], jnp.eye(H, dtype=jnp.float32))       # (P*H, H)
    pmat_pad = jnp.zeros((P * H, HP), jnp.float32).at[:, :H].set(pmat)
    w1_pad = jnp.zeros((HP, HP), jnp.float32).at[:H, :H].set(params["w1"])
    wo_pad = jnp.zeros((HP, OUT_LANES), jnp.float32).at[:H, :P].set(params["wo"])
    head = jnp.concatenate([pmat_pad, w1_pad, wo_pad], axis=0)           # (P*H+2*HP, 128)

    b1_pad = jnp.zeros((1, HP), jnp.float32).at[:, :H].set(params["b1"])
    bo_pad = jnp.zeros((1, OUT_LANES), jnp.float32).at[:, :P].set(params["bo"])
    bias = jnp.concatenate([jnp.tile(bz_f, (1, P)), jnp.tile(bh_f, (1, P)),
                            b1_pad, bo_pad], axis=1)                     # (1, 2PH+HP+128)

    return {"wbd": wbd, "bias": bias, "head": head}


def temporal_gnn_forward(x, a_hat, prep, row_tile=None,
                         compute_dtype=jnp.float32):
    """x: (N, F, P), a_hat: (N, N), prep: output of prepare_params."""
    N, F, P = x.shape
    pf = prep["wbd"].shape[1]

    # x: (N, F, P) -> (N, P*F) with contiguous per-period F-blocks matching wbd.
    # TODO(synk): if the upstream producer can emit (N, P, F) directly, hoist
    # this transpose out of the per-call path as well.
    x_stacked = jnp.transpose(x, (0, 2, 1)).reshape(N, pf)

    # For large N, cast the only O(N^2) operand (and x) to bf16; accumulation
    # stays f32 via preferred_element_type inside the kernel.
    a_hat = a_hat.astype(compute_dtype)
    x_stacked = x_stacked.astype(compute_dtype)

    # Row tiling of a_hat: single tile at small N; 128/256/512-row "parallel"
    # tiles at large N (uses both v7x TensorCores, keeps dense A out of the
    # VMEM cliff on v5e/v7x).  For very large N, add a k-axis over A columns.
    if row_tile is None:
        if N <= 256:
            row_tile = N
        else:
            row_tile = next((t for t in (512, 256, 128) if N % t == 0), N)
    grid = (N // row_tile,)

    resident = lambda arr: pl.BlockSpec(
        arr.shape, lambda i, nd=arr.ndim: (0,) * nd)

    out_pad = pl.pallas_call(
        temporal_gnn_kernel,
        out_shape=jax.ShapeDtypeStruct((N, OUT_LANES), jnp.float32),
        grid=grid,
        in_specs=[
            pl.BlockSpec((row_tile, N), lambda i: (i, 0)),   # a_hat row tile
            resident(x_stacked),                             # features (all periods)
            resident(prep["wbd"]),                           # gate weights
            resident(prep["bias"]),                          # packed biases
            resident(prep["head"]),                          # packed head weights
        ],
        out_specs=pl.BlockSpec((row_tile, OUT_LANES), lambda i: (i, 0)),
        compiler_params=pltpu.CompilerParams(
            dimension_semantics=("parallel",),
            # Raise for full a_hat residency at moderate N on v5e (16 MiB
            # default scoped limit); unnecessary at the demo size.
            vmem_limit_bytes=None,
        ),
    )(a_hat, x_stacked, prep["wbd"], prep["bias"], prep["head"])

    # If downstream can consume the (N, 128) padded slab, return out_pad
    # directly and skip this per-call slice.
    return out_pad[:, :P]


def temporal_gnn_reference(x, a_hat, params):
    """Pure-JAX reference mirroring the PyTorch forward (unfused)."""
    N, F, P = x.shape
    H = params["wz"].shape[1]
    probs = jax.nn.softmax(params["attention"])
    acc = jnp.zeros((N, H), jnp.float32)
    for t in range(P):
        xt = x[:, :, t]
        conv_z = a_hat @ (xt @ params["wz"]) + params["bz"]
        z = jax.nn.sigmoid(conv_z @ params["lz"] + params["blz"])
        conv_h = a_hat @ (xt @ params["wh"]) + params["bh"]
        h_tilde = jnp.tanh(conv_h @ params["lh"] + params["blh"])
        acc = acc + probs[t] * (1.0 - z) * h_tilde
    h = jnp.maximum(acc, 0.0)
    h = h @ params["w1"] + params["b1"]
    h = jnp.maximum(h, 0.0)
    return h @ params["wo"] + params["bo"]


def build_norm_adj(edge_index, num_nodes):
    """Dense GCN normalization: D^{-1/2} (A + I) D^{-1/2}."""
    src, dst = edge_index[0], edge_index[1]
    a = jnp.zeros((num_nodes, num_nodes), jnp.float32)
    a = a.at[dst, src].add(1.0)                      # messages src -> dst
    a = a + jnp.eye(num_nodes, dtype=jnp.float32)    # self loops
    deg = jnp.sum(a, axis=1)
    dinv = jnp.where(deg > 0, 1.0 / jnp.sqrt(deg), 0.0)
    return dinv[:, None] * a * dinv[None, :]


def init_params(key, node_features, periods, hidden):
    """Deterministic synthetic parameter init matching the module's shapes."""
    F, P, H = node_features, periods, hidden
    ks = jax.random.split(key, 8)

    def w(k, shape, scale):
        return jax.random.normal(k, shape, jnp.float32) * scale

    return dict(
        attention=jax.random.uniform(ks[0], (P,), jnp.float32),        # A3TGCN attn
        wz=w(ks[1], (F, H), 0.5), bz=jnp.zeros((1, H), jnp.float32),   # GCNConv_z
        wh=w(ks[2], (F, H), 0.5), bh=jnp.zeros((1, H), jnp.float32),   # GCNConv_h
        lz=w(ks[3], (H, H), 0.1), blz=jnp.full((1, H), 0.01, jnp.float32),  # linear_z (top H rows)
        lh=w(ks[4], (H, H), 0.1), blh=jnp.full((1, H), 0.01, jnp.float32),  # linear_h (top H rows)
        w1=w(ks[5], (H, H), 0.1), b1=jnp.full((1, H), 0.02, jnp.float32),   # linear1
        wo=w(ks[6], (H, P), 0.1), bo=jnp.zeros((1, P), jnp.float32),        # out
    )


if __name__ == "__main__":
    N, F, P, H = 16, 4, 8, 32          # nodes, node_features, periods, hidden_size
    key = jax.random.PRNGKey(0)
    kx, kp = jax.random.split(key)

    # node features for P time steps: (N, F, P), same convention as A3TGCN
    x = jax.random.normal(kx, (N, F, P), jnp.float32)

    # undirected ring graph edge_index (2, 2N)
    s = jnp.arange(N, dtype=jnp.int32)
    d = (s + 1) % N
    edge_index = jnp.stack([jnp.concatenate([s, d]),
                            jnp.concatenate([d, s])], axis=0)

    a_hat = build_norm_adj(edge_index, N)
    params = init_params(kp, F, P, H)

    # One-time weight preparation (hoisted out of the per-call path), then a
    # jitted forward whose per-call work is just the x transpose + the kernel.
    prep = jax.tree_util.tree_map(jax.block_until_ready,
                                  prepare_params(params, F, P, H))
    fwd = jax.jit(functools.partial(temporal_gnn_forward))

    out = fwd(x, a_hat, prep)
    out = jax.block_until_ready(out)
    assert out.shape == (N, P) and out.dtype == jnp.float32

    # Sanity check against the pure-JAX reference (tolerance absorbs the
    # weight-folding reassociation and Mosaic-vs-XLA f32 MXU rounding).
    ref = temporal_gnn_reference(x, a_hat, params)
    max_err = float(jnp.max(jnp.abs(out - ref)))
    assert max_err < 5e-2, f"kernel/reference mismatch: max_err={max_err}"

    print("KERNEL_OK")
</pallas_src>

<mosaic_0001>
module attributes {stable_mosaic.version = 11 : i64} {
  func.func @temporal_gnn_kernel(%arg0: i32, %arg1: memref<16x16xf32, #tpu.memory_space<vmem>>, %arg2: memref<16x32xf32, #tpu.memory_space<vmem>>, %arg3: memref<2x32x256xf32, #tpu.memory_space<vmem>>, %arg4: memref<1x768xf32, #tpu.memory_space<vmem>>, %arg5: memref<512x128xf32, #tpu.memory_space<vmem>>, %arg6: memref<16x128xf32, #tpu.memory_space<vmem>>) attributes {dimension_semantics = [#tpu.dimension_semantics<parallel>], iteration_bounds = array<i64: 1>, scalar_prefetch = 0 : i64, scratch_operands = 0 : i64, tpu.core_type = #tpu.core_type<tc>, window_params = [{transform_indices = @transform_0, window_bounds = array<i64: 16, 16>}, {pipeline_mode = #tpu.pipeline_mode<synchronous>, transform_indices = @transform_1, window_bounds = array<i64: 16, 32>}, {pipeline_mode = #tpu.pipeline_mode<synchronous>, transform_indices = @transform_2, window_bounds = array<i64: 2, 32, 256>}, {pipeline_mode = #tpu.pipeline_mode<synchronous>, transform_indices = @transform_3, window_bounds = array<i64: 1, 768>}, {pipeline_mode = #tpu.pipeline_mode<synchronous>, transform_indices = @transform_4, window_bounds = array<i64: 512, 128>}, {transform_indices = @transform_5, window_bounds = array<i64: 16, 128>}]} {
    %c0 = arith.constant 0 : index
    %c0_0 = arith.constant 0 : index
    %0 = vector.load %arg1[%c0, %c0_0] : memref<16x16xf32, #tpu.memory_space<vmem>>, vector<16x16xf32>
    %c0_1 = arith.constant 0 : index
    %c0_2 = arith.constant 0 : index
    %1 = vector.load %arg2[%c0_1, %c0_2] : memref<16x32xf32, #tpu.memory_space<vmem>>, vector<16x32xf32>
    %cst = arith.constant dense<0.000000e+00> : vector<16x32xf32>
    %2 = tpu.matmul %0, %1, %cst {dimension_numbers = #tpu.dot_dimension_numbers<[1], [0], [0], [1], [0, 0, 1, 1], [], []>} : vector<16x16xf32>, vector<16x32xf32>, vector<16x32xf32> -> vector<16x32xf32>
    %c0_3 = arith.constant 0 : index
    %c0_4 = arith.constant 0 : index
    %c0_5 = arith.constant 0 : index
    %3 = vector.load %arg3[%c0_3, %c0_4, %c0_5] : memref<2x32x256xf32, #tpu.memory_space<vmem>>, vector<1x32x256xf32>
    %4 = vector.shape_cast %3 : vector<1x32x256xf32> to vector<32x256xf32>
    %cst_6 = arith.constant dense<0.000000e+00> : vector<16x256xf32>
    %5 = tpu.matmul %2, %4, %cst_6 {dimension_numbers = #tpu.dot_dimension_numbers<[1], [0], [0], [1], [0, 0, 1, 1], [], []>} : vector<16x32xf32>, vector<32x256xf32>, vector<16x256xf32> -> vector<16x256xf32>
    %c0_7 = arith.constant 0 : index
    %c0_8 = arith.constant 0 : index
    %6 = vector.load %arg4[%c0_7, %c0_8] : memref<1x768xf32, #tpu.memory_space<vmem>>, vector<1x256xf32>
    %7 = vector.broadcast %6 : vector<1x256xf32> to vector<16x256xf32>
    %8 = arith.addf %5, %7 : vector<16x256xf32>
    %c1 = arith.constant 1 : index
    %c0_9 = arith.constant 0 : index
    %c0_10 = arith.constant 0 : index
    %9 = vector.load %arg3[%c1, %c0_9, %c0_10] : memref<2x32x256xf32, #tpu.memory_space<vmem>>, vector<1x32x256xf32>
    %10 = vector.shape_cast %9 : vector<1x32x256xf32> to vector<32x256xf32>
    %cst_11 = arith.constant dense<0.000000e+00> : vector<16x256xf32>
    %11 = tpu.matmul %2, %10, %cst_11 {dimension_numbers = #tpu.dot_dimension_numbers<[1], [0], [0], [1], [0, 0, 1, 1], [], []>} : vector<16x32xf32>, vector<32x256xf32>, vector<16x256xf32> -> vector<16x256xf32>
    %c0_12 = arith.constant 0 : index
    %c256 = arith.constant 256 : index
    %12 = vector.load %arg4[%c0_12, %c256] : memref<1x768xf32, #tpu.memory_space<vmem>>, vector<1x256xf32>
    %13 = vector.broadcast %12 : vector<1x256xf32> to vector<16x256xf32>
    %14 = arith.addf %11, %13 : vector<16x256xf32>
    %15 = arith.negf %8 : vector<16x256xf32>
    %16 = math.exp %15 : vector<16x256xf32>
    %cst_13 = arith.constant 1.000000e+00 : f32
    %17 = vector.broadcast %cst_13 : f32 to vector<16x256xf32>
    %18 = arith.addf %17, %16 : vector<16x256xf32>
    %19 = arith.divf %17, %18 : vector<16x256xf32>
    %20 = math.tanh %14 : vector<16x256xf32>
    %cst_14 = arith.constant 1.000000e+00 : f32
    %21 = vector.broadcast %cst_14 : f32 to vector<16x256xf32>
    %22 = arith.subf %21, %19 : vector<16x256xf32>
    %23 = arith.mulf %22, %20 : vector<16x256xf32>
    %c0_15 = arith.constant 0 : index
    %c0_16 = arith.constant 0 : index
    %24 = vector.load %arg5[%c0_15, %c0_16] : memref<512x128xf32, #tpu.memory_space<vmem>>, vector<256x128xf32>
    %cst_17 = arith.constant dense<0.000000e+00> : vector<16x128xf32>
    %25 = tpu.matmul %23, %24, %cst_17 {dimension_numbers = #tpu.dot_dimension_numbers<[1], [0], [0], [1], [0, 0, 1, 1], [], []>} : vector<16x256xf32>, vector<256x128xf32>, vector<16x128xf32> -> vector<16x128xf32>
    %cst_18 = arith.constant 0.000000e+00 : f32
    %26 = vector.broadcast %cst_18 : f32 to vector<16x128xf32>
    %27 = arith.maximumf %25, %26 : vector<16x128xf32>
    %c256_19 = arith.constant 256 : index
    %c0_20 = arith.constant 0 : index
    %28 = vector.load %arg5[%c256_19, %c0_20] : memref<512x128xf32, #tpu.memory_space<vmem>>, vector<128x128xf32>
    %cst_21 = arith.constant dense<0.000000e+00> : vector<16x128xf32>
    %29 = tpu.matmul %27, %28, %cst_21 {dimension_numbers = #tpu.dot_dimension_numbers<[1], [0], [0], [1], [0, 0, 1, 1], [], []>} : vector<16x128xf32>, vector<128x128xf32>, vector<16x128xf32> -> vector<16x128xf32>
    %c0_22 = arith.constant 0 : index
    %c512 = arith.constant 512 : index
    %30 = vector.load %arg4[%c0_22, %c512] : memref<1x768xf32, #tpu.memory_space<vmem>>, vector<1x128xf32>
    %31 = vector.broadcast %30 : vector<1x128xf32> to vector<16x128xf32>
    %32 = arith.addf %29, %31 : vector<16x128xf32>
    %cst_23 = arith.constant 0.000000e+00 : f32
    %33 = vector.broadcast %cst_23 : f32 to vector<16x128xf32>
    %34 = arith.maximumf %32, %33 : vector<16x128xf32>
    %c384 = arith.constant 384 : index
    %c0_24 = arith.constant 0 : index
    %35 = vector.load %arg5[%c384, %c0_24] : memref<512x128xf32, #tpu.memory_space<vmem>>, vector<128x128xf32>
    %cst_25 = arith.constant dense<0.000000e+00> : vector<16x128xf32>
    %36 = tpu.matmul %34, %35, %cst_25 {dimension_numbers = #tpu.dot_dimension_numbers<[1], [0], [0], [1], [0, 0, 1, 1], [], []>} : vector<16x128xf32>, vector<128x128xf32>, vector<16x128xf32> -> vector<16x128xf32>
    %c0_26 = arith.constant 0 : index
    %c640 = arith.constant 640 : index
    %37 = vector.load %arg4[%c0_26, %c640] : memref<1x768xf32, #tpu.memory_space<vmem>>, vector<1x128xf32>
    %38 = vector.broadcast %37 : vector<1x128xf32> to vector<16x128xf32>
    %39 = arith.addf %36, %38 : vector<16x128xf32>
    %c0_27 = arith.constant 0 : index
    %c0_28 = arith.constant 0 : index
    %40 = vector.load %arg6[%c0_27, %c0_28] : memref<16x128xf32, #tpu.memory_space<vmem>>, vector<16x128xf32>
    tpu.vector_store %arg6[%c0_27, %c0_28], %39 {strides = array<i32>} : memref<16x128xf32, #tpu.memory_space<vmem>>, vector<16x128xf32>,
    return
  }
  func.func @transform_0(%arg0: i32) -> (i32, i32) {
    %c0_i32 = arith.constant 0 : i32
    %c0_i32_0 = arith.constant 0 : i32
    return %arg0, %c0_i32 : i32, i32
  }
  func.func @transform_1(%arg0: i32) -> (i32, i32) {
    %c0_i32 = arith.constant 0 : i32
    %c0_i32_0 = arith.constant 0 : i32
    %c0_i32_1 = arith.constant 0 : i32
    return %c0_i32, %c0_i32_0 : i32, i32
  }
  func.func @transform_2(%arg0: i32) -> (i32, i32, i32) {
    %c0_i32 = arith.constant 0 : i32
    %c0_i32_0 = arith.constant 0 : i32
    %c0_i32_1 = arith.constant 0 : i32
    %c0_i32_2 = arith.constant 0 : i32
    return %c0_i32, %c0_i32_0, %c0_i32_1 : i32, i32, i32
  }
  func.func @transform_3(%arg0: i32) -> (i32, i32) {
    %c0_i32 = arith.constant 0 : i32
    %c0_i32_0 = arith.constant 0 : i32
    %c0_i32_1 = arith.constant 0 : i32
    return %c0_i32, %c0_i32_0 : i32, i32
  }
  func.func @transform_4(%arg0: i32) -> (i32, i32) {
    %c0_i32 = arith.constant 0 : i32
    %c0_i32_0 = arith.constant 0 : i32
    %c0_i32_1 = arith.constant 0 : i32
    return %c0_i32, %c0_i32_0 : i32, i32
  }
  func.func @transform_5(%arg0: i32) -> (i32, i32) {
    %c0_i32 = arith.constant 0 : i32
    %c0_i32_0 = arith.constant 0 : i32
    return %arg0, %c0_i32 : i32, i32
  }
}

</mosaic_0001>

<llo_original>
// kernel: temporal_gnn_forward.1
$region0: #{temporal_gnn_forward.1}
  #allocation0 [shape = 'u32[]', space=smem, size = 0x4, offset = 0x4, fixed_abs, tag = 'smem constant byte address 0x4 - core index']
  #allocation1 [shape = 'u32[144,128]{1,0:T(1,128)}', space=vmem, size = 0x12000, scoped, tag = 'internal scratch']
  %s0 = inlined_call_operand.vmem [shape: f32[16,16], index: 0, kind: input, shape index: {}]
  %s1 = inlined_call_operand.vmem [shape: f32[16,32], index: 1, kind: input, shape index: {}]
  %s2 = inlined_call_operand.hbm [shape: f32[2,32,256], index: 2, kind: input, shape index: {}]
  %s3 = inlined_call_operand.vmem [shape: f32[1,768], index: 3, kind: input, shape index: {}]
  %s4 = inlined_call_operand.hbm [shape: f32[512,128], index: 4, kind: input, shape index: {}]
  %s5 = inlined_call_operand.vmem [shape: f32[16,128], index: 5, kind: output, shape index: {}]
  %s6 = sld [smem:[#allocation0]]
  $region38: #{temporal_gnn_forward.1} parent=0
    _
  %s8 = ssub.s32 1, %s6
  %s9 = scalar_select 0, %s8, %s6
  $region1: #{temporal_gnn_forward.1} parent=0
    #allocation2 [shape = 'u8[65536]{0}', space=vmem, size = 0x10000, scoped, tag = 'input window, operand 2, single buffered']
    #allocation3 [shape = 's32[1]{0}', space=sflag, size = 0x4, scoped, tag = 'scoped memory for temporal_gnn_forward.1']
    #allocation4 [shape = 'u8[262144]{0}', space=vmem, size = 0x40000, scoped, tag = 'input window, operand 4, single buffered']
    #allocation5 [shape = 's32[1]{0}', space=sflag, size = 0x4, scoped, tag = 'scoped memory for temporal_gnn_forward.1']
    %10 = vsyncpa [#allocation3], 0
    %11 = vsyncpa [#allocation5], 0
    // Predicated region
    $region2: #{temporal_gnn_forward.1} parent=1 // pred_check
      _
    $region3: #{temporal_gnn_forward.1} parent=1 // pred_check_branch
      %13 = sbr.rel (0) target = $region5
    $region4: #{temporal_gnn_forward.1} parent=1 // pred_region
      _
    $region5: #{temporal_gnn_forward.1} parent=1 // pred_fallthru
      _
    // Predicated region
    $region6: #{temporal_gnn_forward.1} parent=1 // pred_check
      _
    $region7: #{temporal_gnn_forward.1} parent=1 // pred_check_branch
      %15 = sbr.rel (0) target = $region9
    $region8: #{temporal_gnn_forward.1} parent=1 // pred_region
      _
    $region9: #{temporal_gnn_forward.1} parent=1 // pred_fallthru
      _
    // Predicated region
    $region10: #{temporal_gnn_forward.1} parent=1 // pred_check
      _
    $region11: #{temporal_gnn_forward.1} parent=1 // pred_check_branch
      %17 = sbr.rel (0) target = $region13
    $region12: #{temporal_gnn_forward.1} parent=1 // pred_region
      %s19 = ssub.s32 2048, 2048
      %20 = vsyncadd [#allocation3], %s19
      %s21 = sshll.u32 [#allocation2], 4
      %s22 = int_to_ptr.vmem [resolvable:$true] %s21
      %27 = dma.hbm_to_vmem [thread:$0]  %s2, 2048, %s22, [#allocation3], 256, 256, 16
    $region13: #{temporal_gnn_forward.1} parent=1 // pred_fallthru
      _
    // Predicated region
    $region14: #{temporal_gnn_forward.1} parent=1 // pred_check
      _
    $region15: #{temporal_gnn_forward.1} parent=1 // pred_check_branch
      %29 = sbr.rel (0) target = $region17
    $region16: #{temporal_gnn_forward.1} parent=1 // pred_region
      _
    $region17: #{temporal_gnn_forward.1} parent=1 // pred_fallthru
      _
    // Predicated region
    $region18: #{temporal_gnn_forward.1} parent=1 // pred_check
      _
    $region19: #{temporal_gnn_forward.1} parent=1 // pred_check_branch
      %31 = sbr.rel (0) target = $region21
    $region20: #{temporal_gnn_forward.1} parent=1 // pred_region
      %s33 = ssub.s32 8192, 8192
      %34 = vsyncadd [#allocation5], %s33
      %s35 = sshll.u32 [#allocation4], 4
      %s36 = int_to_ptr.vmem [resolvable:$true] %s35
      %41 = dma.hbm_to_vmem [thread:$0]  %s4, 8192, %s36, [#allocation5], 128, 128, 8
    $region21: #{temporal_gnn_forward.1} parent=1 // pred_fallthru
      _
    // Predicated region
    $region22: #{temporal_gnn_forward.1} parent=1 // pred_check
      _
    $region23: #{temporal_gnn_forward.1} parent=1 // pred_check_branch
      %43 = sbr.rel (0) target = $region25
    $region24: #{temporal_gnn_forward.1} parent=1 // pred_region
      %44 = dma.done [#allocation3], 2048
    $region25: #{temporal_gnn_forward.1} parent=1 // pred_fallthru
      _
    // Predicated region
    $region26: #{temporal_gnn_forward.1} parent=1 // pred_check
      _
    $region27: #{temporal_gnn_forward.1} parent=1 // pred_check_branch
      %46 = sbr.rel (0) target = $region29
    $region28: #{temporal_gnn_forward.1} parent=1 // pred_region
      %47 = dma.done [#allocation5], 8192
    $region29: #{temporal_gnn_forward.1} parent=1 // pred_fallthru
      _
    %v48 = vld [vmem:[%s0] sm:$0xff]
    %v49 = vld [vmem:[%s0 + $0x8] sm:$0xff]
    %v50 = vld [vmem:[%s1] sm:$0xff]
    %v51 = vld [vmem:[%s1 + $0x8] sm:$0xff]
    %vm52 = vcmask 130048
    %v54 = vsel %vm52, %v48, 0
    %v57 = vsel %vm52, %v49, 0
    %59 = vmatprep.subr.mxu0 0.0
    %60 = vmatpush1.msra.mxu0 0.0
    %61 = vmatprep.subr.mxu0 0.0
    %62 = vmatpush1.msra.mxu0 0.0
    %63 = vmatprep.subr.mxu0 0.0
    %64 = vmatpush1.msra.mxu0 0.0
    %65 = vmatprep.subr.mxu0 0.0
    %66 = vmatpush1.msra.mxu0 0.0
    %67 = vmatprep.subr.mxu0 0.0
    %68 = vmatpush1.msra.mxu0 0.0
    %69 = vmatprep.subr.mxu0 0.0
    %70 = vmatpush1.msra.mxu0 0.0
    %71 = vmatprep.subr.mxu0 0.0
    %72 = vmatpush1.msra.mxu0 0.0
    %73 = vmatprep.subr.mxu0 0.0
    %74 = vmatpush1.msra.mxu0 0.0
    %75 = vmatprep.subr.mxu0 0.0
    %76 = vmatpush1.msra.mxu0 0.0
    %77 = vmatprep.subr.mxu0 0.0
    %78 = vmatpush1.msra.mxu0 0.0
    %79 = vmatprep.subr.mxu0 0.0
    %80 = vmatpush1.msra.mxu0 0.0
    %81 = vmatprep.subr.mxu0 0.0
    %82 = vmatpush1.msra.mxu0 0.0
    %83 = vmatprep.subr.mxu0 0.0
    %84 = vmatpush1.msra.mxu0 0.0
    %85 = vmatprep.subr.mxu0 0.0
    %86 = vmatpush1.msra.mxu0 0.0
    %87 = vmatprep.subr.mxu0 0.0
    %88 = vmatpush1.msra.mxu0 %v51
    %89 = vmatprep.subr.mxu0 0.0
    %90 = vmatpush1.msra.mxu0 %v50
    %91 = vmatprep.subr.mxu0 0.0
    %92 = vmatpush2.msra.mxu0 0.0
    %93 = vmatprep.subr.mxu0 0.0
    %94 = vmatpush2.msra.mxu0 0.0
    %95 = vmatprep.subr.mxu0 0.0
    %96 = vmatpush2.msra.mxu0 0.0
    %97 = vmatprep.subr.mxu0 0.0
    %98 = vmatpush2.msra.mxu0 0.0
    %99 = vmatprep.subr.mxu0 0.0
    %100 = vmatpush2.msra.mxu0 0.0
    %101 = vmatprep.subr.mxu0 0.0
    %102 = vmatpush2.msra.mxu0 0.0
    %103 = vmatprep.subr.mxu0 0.0
    %104 = vmatpush2.msra.mxu0 0.0
    %105 = vmatprep.subr.mxu0 0.0
    %106 = vmatpush2.msra.mxu0 0.0
    %107 = vmatprep.subr.mxu0 0.0
    %108 = vmatpush2.msra.mxu0 0.0
    %109 = vmatprep.subr.mxu0 0.0
    %110 = vmatpush2.msra.mxu0 0.0
    %111 = vmatprep.subr.mxu0 0.0
    %112 = vmatpush2.msra.mxu0 0.0
    %113 = vmatprep.subr.mxu0 0.0
    %114 = vmatpush2.msra.mxu0 0.0
    %115 = vmatprep.subr.mxu0 0.0
    %116 = vmatpush2.msra.mxu0 0.0
    %117 = vmatprep.subr.mxu0 0.0
    %118 = vmatpush2.msra.mxu0 0.0
    %119 = vmatprep.subr.mxu0 0.0
    %120 = vmatpush2.msra.mxu0 0.0
    %121 = vmatprep.subr.mxu0 0.0
    %122 = vmatpush2.msra.mxu0 0.0
    %123 = vmatprep.mubr.f32.mxu0 0.0
    %124 = vmatmul.mubr.f32.gmra.mxu0 %v54
    %v125 = vpop.f32.mrf.mxu0
    %v126 = vadd.f32 0.0, %v125
    %v127 = vpop.f32.mrf.mxu0
    %128 = vmatprep.mubr.f32.mxu0 0.0
    %129 = vmatmul.mubr.f32.gmra.mxu0 %v57
    %v130 = vpop.f32.mrf.mxu0
    %v131 = vadd.f32 0.0, %v130
    %v132 = vpop.f32.mrf.mxu0
    %133 = vdwg.mxu0
    %v134 = vld [vmem:[#allocation2] sm:$0xff]
    %v135 = vld [vmem:[#allocation2 + $0x8] sm:$0xff]
    %v136 = vld [vmem:[#allocation2 + $0x10] sm:$0xff]
    %v137 = vld [vmem:[#allocation2 + $0x18] sm:$0xff]
    %v138 = vld [vmem:[#allocation2 + $0x20] sm:$0xff]
    %v139 = vld [vmem:[#allocation2 + $0x28] sm:$0xff]
    %v140 = vld [vmem:[#allocation2 + $0x30] sm:$0xff]
    %v141 = vld [vmem:[#allocation2 + $0x38] sm:$0xff]
    %v142 = vld [vmem:[%s3] sm:$0x3]
    %v144 = vlaneseq
    %v145 = vshrl.u32 %v144, 7
    %v146 = vsub.s32 0, %v145
    %v147 = vrot.slane %v142, %v146
    %v148 = vlaneseq
    %v149 = vshrl.u32 %v148, 7
    %v150 = vsub.s32 1, %v149
    %v151 = vrot.slane %v142, %v150
    %vm154 = vcmask 261120
    %v156 = vsel %vm154, %v126, 0
    %v159 = vsel %vm154, %v131, 0
    %161 = vmatprep.subr.mxu0 0.0
    %162 = vmatpush1.msra.mxu0 0.0
    %163 = vmatprep.subr.mxu0 0.0
    %164 = vmatpush1.msra.mxu0 0.0
    %165 = vmatprep.subr.mxu0 0.0
    %166 = vmatpush1.msra.mxu0 0.0
    %167 = vmatprep.subr.mxu0 0.0
    %168 = vmatpush1.msra.mxu0 0.0
    %169 = vmatprep.subr.mxu0 0.0
    %170 = vmatpush1.msra.mxu0 0.0
    %171 = vmatprep.subr.mxu0 0.0
    %172 = vmatpush1.msra.mxu0 0.0
    %173 = vmatprep.subr.mxu0 0.0
    %174 = vmatpush1.msra.mxu0 0.0
    %175 = vmatprep.subr.mxu0 0.0
    %176 = vmatpush1.msra.mxu0 0.0
    %177 = vmatprep.subr.mxu0 0.0
    %178 = vmatpush1.msra.mxu0 0.0
    %179 = vmatprep.subr.mxu0 0.0
    %180 = vmatpush1.msra.mxu0 0.0
    %181 = vmatprep.subr.mxu0 0.0
    %182 = vmatpush1.msra.mxu0 0.0
    %183 = vmatprep.subr.mxu0 0.0
    %184 = vmatpush1.msra.mxu0 0.0
    %185 = vmatprep.subr.mxu0 %v141
    %186 = vmatpush1.msra.mxu0 %v140
    %187 = vmatprep.subr.mxu0 %v139
    %188 = vmatpush1.msra.mxu0 %v138
    %189 = vmatprep.subr.mxu0 %v137
    %190 = vmatpush1.msra.mxu0 %v136
    %191 = vmatprep.subr.mxu0 %v135
    %192 = vmatpush1.msra.mxu0 %v134
    %193 = vmatprep.subr.mxu0 0.0
    %194 = vmatpush2.msra.mxu0 0.0
    %195 = vmatprep.subr.mxu0 0.0
    %196 = vmatpush2.msra.mxu0 0.0
    %197 = vmatprep.subr.mxu0 0.0
    %198 = vmatpush2.msra.mxu0 0.0
    %199 = vmatprep.subr.mxu0 0.0
    %200 = vmatpush2.msra.mxu0 0.0
    %201 = vmatprep.subr.mxu0 0.0
    %202 = vmatpush2.msra.mxu0 0.0
    %203 = vmatprep.subr.mxu0 0.0
    %204 = vmatpush2.msra.mxu0 0.0
    %205 = vmatprep.subr.mxu0 0.0
    %206 = vmatpush2.msra.mxu0 0.0
    %207 = vmatprep.subr.mxu0 0.0
    %208 = vmatpush2.msra.mxu0 0.0
    %209 = vmatprep.subr.mxu0 0.0
    %210 = vmatpush2.msra.mxu0 0.0
    %211 = vmatprep.subr.mxu0 0.0
    %212 = vmatpush2.msra.mxu0 0.0
    %213 = vmatprep.subr.mxu0 0.0
    %214 = vmatpush2.msra.mxu0 0.0
    %215 = vmatprep.subr.mxu0 0.0
    %216 = vmatpush2.msra.mxu0 0.0
    %217 = vmatprep.subr.mxu0 0.0
    %218 = vmatpush2.msra.mxu0 0.0
    %219 = vmatprep.subr.mxu0 0.0
    %220 = vmatpush2.msra.mxu0 0.0
    %221 = vmatprep.subr.mxu0 0.0
    %222 = vmatpush2.msra.mxu0 0.0
    %223 = vmatprep.subr.mxu0 0.0
    %224 = vmatpush2.msra.mxu0 0.0
    %225 = vmatprep.mubr.f32.mxu0 0.0
    %226 = vmatmul.mubr.f32.gmra.mxu0 %v156
    %v227 = vpop.f32.mrf.mxu0
    %v228 = vadd.f32 %v147, %v227
    %v229 = vpop.f32.mrf.mxu0
    %v230 = vadd.f32 %v151, %v229
    %231 = vmatprep.mubr.f32.mxu0 0.0
    %232 = vmatmul.mubr.f32.gmra.mxu0 %v159
    %v233 = vpop.f32.mrf.mxu0
    %v234 = vadd.f32 %v147, %v233
    %v235 = vpop.f32.mrf.mxu0
    %v236 = vadd.f32 %v151, %v235
    %237 = vdwg.mxu0
    %s238 = scalar_lea.vmem [#allocation2], 64
    %v239 = vld [vmem:[%s238] sm:$0xff]
    %v240 = vld [vmem:[%s238 + $0x8] sm:$0xff]
    %v241 = vld [vmem:[%s238 + $0x10] sm:$0xff]
    %v242 = vld [vmem:[%s238 + $0x18] sm:$0xff]
    %v243 = vld [vmem:[%s238 + $0x20] sm:$0xff]
    %v244 = vld [vmem:[%s238 + $0x28] sm:$0xff]
    %v245 = vld [vmem:[%s238 + $0x30] sm:$0xff]
    %v246 = vld [vmem:[%s238 + $0x38] sm:$0xff]
    %v247 = vld [vmem:[%s3 + $0x2] sm:$0x3]
    %v249 = vlaneseq
    %v250 = vshrl.u32 %v249, 7
    %v251 = vsub.s32 0, %v250
    %v252 = vrot.slane %v247, %v251
    %v253 = vlaneseq
    %v254 = vshrl.u32 %v253, 7
    %v255 = vsub.s32 1, %v254
    %v256 = vrot.slane %v247, %v255
    %259 = vmatprep.subr.mxu0 0.0
    %260 = vmatpush1.msra.mxu0 0.0
    %261 = vmatprep.subr.mxu0 0.0
    %262 = vmatpush1.msra.mxu0 0.0
    %263 = vmatprep.subr.mxu0 0.0
    %264 = vmatpush1.msra.mxu0 0.0
    %265 = vmatprep.subr.mxu0 0.0
    %266 = vmatpush1.msra.mxu0 0.0
    %267 = vmatprep.subr.mxu0 0.0
    %268 = vmatpush1.msra.mxu0 0.0
    %269 = vmatprep.subr.mxu0 0.0
    %270 = vmatpush1.msra.mxu0 0.0
    %271 = vmatprep.subr.mxu0 0.0
    %272 = vmatpush1.msra.mxu0 0.0
    %273 = vmatprep.subr.mxu0 0.0
    %274 = vmatpush1.msra.mxu0 0.0
    %275 = vmatprep.subr.mxu0 0.0
    %276 = vmatpush1.msra.mxu0 0.0
    %277 = vmatprep.subr.mxu0 0.0
    %278 = vmatpush1.msra.mxu0 0.0
    %279 = vmatprep.subr.mxu0 0.0
    %280 = vmatpush1.msra.mxu0 0.0
    %281 = vmatprep.subr.mxu0 0.0
    %282 = vmatpush1.msra.mxu0 0.0
    %283 = vmatprep.subr.mxu0 %v246
    %284 = vmatpush1.msra.mxu0 %v245
    %285 = vmatprep.subr.mxu0 %v244
    %286 = vmatpush1.msra.mxu0 %v243
    %287 = vmatprep.subr.mxu0 %v242
    %288 = vmatpush1.msra.mxu0 %v241
    %289 = vmatprep.subr.mxu0 %v240
    %290 = vmatpush1.msra.mxu0 %v239
    %291 = vmatprep.subr.mxu0 0.0
    %292 = vmatpush2.msra.mxu0 0.0
    %293 = vmatprep.subr.mxu0 0.0
    %294 = vmatpush2.msra.mxu0 0.0
    %295 = vmatprep.subr.mxu0 0.0
    %296 = vmatpush2.msra.mxu0 0.0
    %297 = vmatprep.subr.mxu0 0.0
    %298 = vmatpush2.msra.mxu0 0.0
    %299 = vmatprep.subr.mxu0 0.0
    %300 = vmatpush2.msra.mxu0 0.0
    %301 = vmatprep.subr.mxu0 0.0
    %302 = vmatpush2.msra.mxu0 0.0
    %303 = vmatprep.subr.mxu0 0.0
    %304 = vmatpush2.msra.mxu0 0.0
    %305 = vmatprep.subr.mxu0 0.0
    %306 = vmatpush2.msra.mxu0 0.0
    %307 = vmatprep.subr.mxu0 0.0
    %308 = vmatpush2.msra.mxu0 0.0
    %309 = vmatprep.subr.mxu0 0.0
    %310 = vmatpush2.msra.mxu0 0.0
    %311 = vmatprep.subr.mxu0 0.0
    %312 = vmatpush2.msra.mxu0 0.0
    %313 = vmatprep.subr.mxu0 0.0
    %314 = vmatpush2.msra.mxu0 0.0
    %315 = vmatprep.subr.mxu0 0.0
    %316 = vmatpush2.msra.mxu0 0.0
    %317 = vmatprep.subr.mxu0 0.0
    %318 = vmatpush2.msra.mxu0 0.0
    %319 = vmatprep.subr.mxu0 0.0
    %320 = vmatpush2.msra.mxu0 0.0
    %321 = vmatprep.subr.mxu0 0.0
    %322 = vmatpush2.msra.mxu0 0.0
    %323 = vmatprep.mubr.f32.mxu0 0.0
    %324 = vmatmul.mubr.f32.gmra.mxu0 %v156
    %v325 = vpop.f32.mrf.mxu0
    %v326 = vadd.f32 %v252, %v325
    %v327 = vpop.f32.mrf.mxu0
    %v328 = vadd.f32 %v256, %v327
    %329 = vmatprep.mubr.f32.mxu0 0.0
    %330 = vmatmul.mubr.f32.gmra.mxu0 %v159
    %v331 = vpop.f32.mrf.mxu0
    %v332 = vadd.f32 %v252, %v331
    %v333 = vpop.f32.mrf.mxu0
    %v334 = vadd.f32 %v256, %v333
    %335 = vdwg.mxu0
    %v336 = vxor.u32 %v228, 2147483648
    %v337 = vxor.u32 %v230, 2147483648
    %v338 = vxor.u32 %v234, 2147483648
    %v339 = vxor.u32 %v236, 2147483648
    %v340 = vmul.f32 %v336, 1.442695
    %v341 = vpow.pop %v340
    %v342 = vmul.f32 %v337, 1.442695
    %v343 = vpow.pop %v342
    %v344 = vmul.f32 %v338, 1.442695
    %v345 = vpow.pop %v344
    %v346 = vmul.f32 %v339, 1.442695
    %v347 = vpow.pop %v346
    %v348 = vadd.f32 %v341, 1.0
    %v349 = vadd.f32 %v343, 1.0
    %v350 = vadd.f32 %v345, 1.0
    %v351 = vadd.f32 %v347, 1.0
    %v352 = vrcp.pop %v348
    %v353 = vmul.f32 1.0, %v352
    %v354 = vrcp.pop %v349
    %v355 = vmul.f32 1.0, %v354
    %v356 = vrcp.pop %v350
    %v357 = vmul.f32 1.0, %v356
    %v358 = vrcp.pop %v351
    %v359 = vmul.f32 1.0, %v358
    %v360 = vtanh.pop %v326
    %v361 = vtanh.pop %v328
    %v362 = vtanh.pop %v332
    %v363 = vtanh.pop %v334
    %v364 = vsub.f32 1.0, %v353
    %v365 = vsub.f32 1.0, %v355
    %v366 = vsub.f32 1.0, %v357
    %v367 = vsub.f32 1.0, %v359
    %v368 = vmul.f32 %v364, %v360
    %v369 = vmul.f32 %v365, %v361
    %v370 = vmul.f32 %v366, %v362
    %v371 = vmul.f32 %v367, %v363
    %v372 = vld [vmem:[#allocation4] sm:$0xff]
    %v373 = vld [vmem:[#allocation4 + $0x8] sm:$0xff]
    %v374 = vld [vmem:[#allocation4 + $0x10] sm:$0xff]
    %v375 = vld [vmem:[#allocation4 + $0x18] sm:$0xff]
    %v376 = vld [vmem:[#allocation4 + $0x20] sm:$0xff]
    %v377 = vld [vmem:[#allocation4 + $0x28] sm:$0xff]
    %v378 = vld [vmem:[#allocation4 + $0x30] sm:$0xff]
    %v379 = vld [vmem:[#allocation4 + $0x38] sm:$0xff]
    %v380 = vld [vmem:[#allocation4 + $0x40] sm:$0xff]
    %v381 = vld [vmem:[#allocation4 + $0x48] sm:$0xff]
    %v382 = vld [vmem:[#allocation4 + $0x50] sm:$0xff]
    %v383 = vld [vmem:[#allocation4 + $0x58] sm:$0xff]
    %v384 = vld [vmem:[#allocation4 + $0x60] sm:$0xff]
    %v385 = vld [vmem:[#allocation4 + $0x68] sm:$0xff]
    %v386 = vld [vmem:[#allocation4 + $0x70] sm:$0xff]
    %v387 = vld [vmem:[#allocation4 + $0x78] sm:$0xff]
    %v388 = vld [vmem:[#allocation4 + $0x80] sm:$0xff]
    %v389 = vld [vmem:[#allocation4 + $0x88] sm:$0xff]
    %v390 = vld [vmem:[#allocation4 + $0x90] sm:$0xff]
    %v391 = vld [vmem:[#allocation4 + $0x98] sm:$0xff]
    %v392 = vld [vmem:[#allocation4 + $0xa0] sm:$0xff]
    %v393 = vld [vmem:[#allocation4 + $0xa8] sm:$0xff]
    %v394 = vld [vmem:[#allocation4 + $0xb0] sm:$0xff]
    %v395 = vld [vmem:[#allocation4 + $0xb8] sm:$0xff]
    %v396 = vld [vmem:[#allocation4 + $0xc0] sm:$0xff]
    %v397 = vld [vmem:[#allocation4 + $0xc8] sm:$0xff]
    %v398 = vld [vmem:[#allocation4 + $0xd0] sm:$0xff]
    %v399 = vld [vmem:[#allocation4 + $0xd8] sm:$0xff]
    %v400 = vld [vmem:[#allocation4 + $0xe0] sm:$0xff]
    %v401 = vld [vmem:[#allocation4 + $0xe8] sm:$0xff]
    %v402 = vld [vmem:[#allocation4 + $0xf0] sm:$0xff]
    %v403 = vld [vmem:[#allocation4 + $0xf8] sm:$0xff]
    %404 = vmatprep.subr.mxu0 0.0
    %405 = vmatpush1.msra.mxu0 %v387
    %406 = vmatprep.subr.mxu0 0.0
    %407 = vmatpush1.msra.mxu0 %v386
    %408 = vmatprep.subr.mxu0 0.0
    %409 = vmatpush1.msra.mxu0 %v385
    %410 = vmatprep.subr.mxu0 0.0
    %411 = vmatpush1.msra.mxu0 %v384
    %412 = vmatprep.subr.mxu0 0.0
    %413 = vmatpush1.msra.mxu0 %v383
    %414 = vmatprep.subr.mxu0 0.0
    %415 = vmatpush1.msra.mxu0 %v382
    %416 = vmatprep.subr.mxu0 0.0
    %417 = vmatpush1.msra.mxu0 %v381
    %418 = vmatprep.subr.mxu0 0.0
    %419 = vmatpush1.msra.mxu0 %v380
    %420 = vmatprep.subr.mxu0 0.0
    %421 = vmatpush1.msra.mxu0 %v379
    %422 = vmatprep.subr.mxu0 0.0
    %423 = vmatpush1.msra.mxu0 %v378
    %424 = vmatprep.subr.mxu0 0.0
    %425 = vmatpush1.msra.mxu0 %v377
    %426 = vmatprep.subr.mxu0 0.0
    %427 = vmatpush1.msra.mxu0 %v376
    %428 = vmatprep.subr.mxu0 0.0
    %429 = vmatpush1.msra.mxu0 %v375
    %430 = vmatprep.subr.mxu0 0.0
    %431 = vmatpush1.msra.mxu0 %v374
    %432 = vmatprep.subr.mxu0 0.0
    %433 = vmatpush1.msra.mxu0 %v373
    %434 = vmatprep.subr.mxu0 0.0
    %435 = vmatpush1.msra.mxu0 %v372
    %436 = vmatprep.subr.mxu0 0.0
    %437 = vmatpush2.msra.mxu0 %v403
    %438 = vmatprep.subr.mxu0 0.0
    %439 = vmatpush2.msra.mxu0 %v402
    %440 = vmatprep.subr.mxu0 0.0
    %441 = vmatpush2.msra.mxu0 %v401
    %442 = vmatprep.subr.mxu0 0.0
    %443 = vmatpush2.msra.mxu0 %v400
    %444 = vmatprep.subr.mxu0 0.0
    %445 = vmatpush2.msra.mxu0 %v399
    %446 = vmatprep.subr.mxu0 0.0
    %447 = vmatpush2.msra.mxu0 %v398
    %448 = vmatprep.subr.mxu0 0.0
    %449 = vmatpush2.msra.mxu0 %v397
    %450 = vmatprep.subr.mxu0 0.0
    %451 = vmatpush2.msra.mxu0 %v396
    %452 = vmatprep.subr.mxu0 0.0
    %453 = vmatpush2.msra.mxu0 %v395
    %454 = vmatprep.subr.mxu0 0.0
    %455 = vmatpush2.msra.mxu0 %v394
    %456 = vmatprep.subr.mxu0 0.0
    %457 = vmatpush2.msra.mxu0 %v393
    %458 = vmatprep.subr.mxu0 0.0
    %459 = vmatpush2.msra.mxu0 %v392
    %460 = vmatprep.subr.mxu0 0.0
    %461 = vmatpush2.msra.mxu0 %v391
    %462 = vmatprep.subr.mxu0 0.0
    %463 = vmatpush2.msra.mxu0 %v390
    %464 = vmatprep.subr.mxu0 0.0
    %465 = vmatpush2.msra.mxu0 %v389
    %466 = vmatprep.subr.mxu0 0.0
    %467 = vmatpush2.msra.mxu0 %v388
    %468 = vmatprep.mubr.f32.mxu0 %v369
    %469 = vmatmul.mubr.f32.gmra.mxu0 %v368
    %v470 = vpop.f32.mrf.mxu0
    %v471 = vadd.f32 0.0, %v470
    %v472 = vpop.f32.mrf.mxu0
    %473 = vmatprep.mubr.f32.mxu0 %v371
    %474 = vmatmul.mubr.f32.gmra.mxu0 %v370
    %v475 = vpop.f32.mrf.mxu0
    %v476 = vadd.f32 0.0, %v475
    %v477 = vpop.f32.mrf.mxu0
    %478 = vdwg.mxu0
    %v479 = vmax.f32 %v471, 0.0
    %v480 = vmax.f32 %v476, 0.0
    %v481 = vld [vmem:[#allocation4 + $0x100] sm:$0xff]
    %v482 = vld [vmem:[#allocation4 + $0x108] sm:$0xff]
    %v483 = vld [vmem:[#allocation4 + $0x110] sm:$0xff]
    %v484 = vld [vmem:[#allocation4 + $0x118] sm:$0xff]
    %v485 = vld [vmem:[#allocation4 + $0x120] sm:$0xff]
    %v486 = vld [vmem:[#allocation4 + $0x128] sm:$0xff]
    %v487 = vld [vmem:[#allocation4 + $0x130] sm:$0xff]
    %v488 = vld [vmem:[#allocation4 + $0x138] sm:$0xff]
    %v489 = vld [vmem:[#allocation4 + $0x140] sm:$0xff]
    %v490 = vld [vmem:[#allocation4 + $0x148] sm:$0xff]
    %v491 = vld [vmem:[#allocation4 + $0x150] sm:$0xff]
    %v492 = vld [vmem:[#allocation4 + $0x158] sm:$0xff]
    %v493 = vld [vmem:[#allocation4 + $0x160] sm:$0xff]
    %v494 = vld [vmem:[#allocation4 + $0x168] sm:$0xff]
    %v495 = vld [vmem:[#allocation4 + $0x170] sm:$0xff]
    %v496 = vld [vmem:[#allocation4 + $0x178] sm:$0xff]
    %v497 = vld [vmem:[%s3 + $0x4] sm:$0x1]
    %v499 = vlaneseq
    %v500 = vshrl.u32 %v499, 7
    %v501 = vsub.s32 0, %v500
    %v502 = vrot.slane %v497, %v501
    %504 = vmatprep.subr.mxu0 0.0
    %505 = vmatpush1.msra.mxu0 %v496
    %506 = vmatprep.subr.mxu0 0.0
    %507 = vmatpush1.msra.mxu0 %v495
    %508 = vmatprep.subr.mxu0 0.0
    %509 = vmatpush1.msra.mxu0 %v494
    %510 = vmatprep.subr.mxu0 0.0
    %511 = vmatpush1.msra.mxu0 %v493
    %512 = vmatprep.subr.mxu0 0.0
    %513 = vmatpush1.msra.mxu0 %v492
    %514 = vmatprep.subr.mxu0 0.0
    %515 = vmatpush1.msra.mxu0 %v491
    %516 = vmatprep.subr.mxu0 0.0
    %517 = vmatpush1.msra.mxu0 %v490
    %518 = vmatprep.subr.mxu0 0.0
    %519 = vmatpush1.msra.mxu0 %v489
    %520 = vmatprep.subr.mxu0 0.0
    %521 = vmatpush1.msra.mxu0 %v488
    %522 = vmatprep.subr.mxu0 0.0
    %523 = vmatpush1.msra.mxu0 %v487
    %524 = vmatprep.subr.mxu0 0.0
    %525 = vmatpush1.msra.mxu0 %v486
    %526 = vmatprep.subr.mxu0 0.0
    %527 = vmatpush1.msra.mxu0 %v485
    %528 = vmatprep.subr.mxu0 0.0
    %529 = vmatpush1.msra.mxu0 %v484
    %530 = vmatprep.subr.mxu0 0.0
    %531 = vmatpush1.msra.mxu0 %v483
    %532 = vmatprep.subr.mxu0 0.0
    %533 = vmatpush1.msra.mxu0 %v482
    %534 = vmatprep.subr.mxu0 0.0
    %535 = vmatpush1.msra.mxu0 %v481
    %536 = vmatprep.subr.mxu0 0.0
    %537 = vmatpush2.msra.mxu0 0.0
    %538 = vmatprep.subr.mxu0 0.0
    %539 = vmatpush2.msra.mxu0 0.0
    %540 = vmatprep.subr.mxu0 0.0
    %541 = vmatpush2.msra.mxu0 0.0
    %542 = vmatprep.subr.mxu0 0.0
    %543 = vmatpush2.msra.mxu0 0.0
    %544 = vmatprep.subr.mxu0 0.0
    %545 = vmatpush2.msra.mxu0 0.0
    %546 = vmatprep.subr.mxu0 0.0
    %547 = vmatpush2.msra.mxu0 0.0
    %548 = vmatprep.subr.mxu0 0.0
    %549 = vmatpush2.msra.mxu0 0.0
    %550 = vmatprep.subr.mxu0 0.0
    %551 = vmatpush2.msra.mxu0 0.0
    %552 = vmatprep.subr.mxu0 0.0
    %553 = vmatpush2.msra.mxu0 0.0
    %554 = vmatprep.subr.mxu0 0.0
    %555 = vmatpush2.msra.mxu0 0.0
    %556 = vmatprep.subr.mxu0 0.0
    %557 = vmatpush2.msra.mxu0 0.0
    %558 = vmatprep.subr.mxu0 0.0
    %559 = vmatpush2.msra.mxu0 0.0
    %560 = vmatprep.subr.mxu0 0.0
    %561 = vmatpush2.msra.mxu0 0.0
    %562 = vmatprep.subr.mxu0 0.0
    %563 = vmatpush2.msra.mxu0 0.0
    %564 = vmatprep.subr.mxu0 0.0
    %565 = vmatpush2.msra.mxu0 0.0
    %566 = vmatprep.subr.mxu0 0.0
    %567 = vmatpush2.msra.mxu0 0.0
    %568 = vmatprep.mubr.f32.mxu0 0.0
    %569 = vmatmul.mubr.f32.gmra.mxu0 %v479
    %v570 = vpop.f32.mrf.mxu0
    %v571 = vadd.f32 %v502, %v570
    %v572 = vpop.f32.mrf.mxu0
    %573 = vmatprep.mubr.f32.mxu0 0.0
    %574 = vmatmul.mubr.f32.gmra.mxu0 %v480
    %v575 = vpop.f32.mrf.mxu0
    %v576 = vadd.f32 %v502, %v575
    %v577 = vpop.f32.mrf.mxu0
    %578 = vdwg.mxu0
    %v579 = vmax.f32 %v571, 0.0
    %v580 = vmax.f32 %v576, 0.0
    %v581 = vld [vmem:[#allocation4 + $0x180] sm:$0xff]
    %v582 = vld [vmem:[#allocation4 + $0x188] sm:$0xff]
    %v583 = vld [vmem:[#allocation4 + $0x190] sm:$0xff]
    %v584 = vld [vmem:[#allocation4 + $0x198] sm:$0xff]
    %v585 = vld [vmem:[#allocation4 + $0x1a0] sm:$0xff]
    %v586 = vld [vmem:[#allocation4 + $0x1a8] sm:$0xff]
    %v587 = vld [vmem:[#allocation4 + $0x1b0] sm:$0xff]
    %v588 = vld [vmem:[#allocation4 + $0x1b8] sm:$0xff]
    %v589 = vld [vmem:[#allocation4 + $0x1c0] sm:$0xff]
    %v590 = vld [vmem:[#allocation4 + $0x1c8] sm:$0xff]
    %v591 = vld [vmem:[#allocation4 + $0x1d0] sm:$0xff]
    %v592 = vld [vmem:[#allocation4 + $0x1d8] sm:$0xff]
    %v593 = vld [vmem:[#allocation4 + $0x1e0] sm:$0xff]
    %v594 = vld [vmem:[#allocation4 + $0x1e8] sm:$0xff]
    %v595 = vld [vmem:[#allocation4 + $0x1f0] sm:$0xff]
    %v596 = vld [vmem:[#allocation4 + $0x1f8] sm:$0xff]
    %v597 = vld [vmem:[%s3 + $0x5] sm:$0x1]
    %v599 = vlaneseq
    %v600 = vshrl.u32 %v599, 7
    %v601 = vsub.s32 0, %v600
    %v602 = vrot.slane %v597, %v601
    %604 = vmatprep.subr.mxu0 0.0
    %605 = vmatpush1.msra.mxu0 %v596
    %606 = vmatprep.subr.mxu0 0.0
    %607 = vmatpush1.msra.mxu0 %v595
    %608 = vmatprep.subr.mxu0 0.0
    %609 = vmatpush1.msra.mxu0 %v594
    %610 = vmatprep.subr.mxu0 0.0
    %611 = vmatpush1.msra.mxu0 %v593
    %612 = vmatprep.subr.mxu0 0.0
    %613 = vmatpush1.msra.mxu0 %v592
    %614 = vmatprep.subr.mxu0 0.0
    %615 = vmatpush1.msra.mxu0 %v591
    %616 = vmatprep.subr.mxu0 0.0
    %617 = vmatpush1.msra.mxu0 %v590
    %618 = vmatprep.subr.mxu0 0.0
    %619 = vmatpush1.msra.mxu0 %v589
    %620 = vmatprep.subr.mxu0 0.0
    %621 = vmatpush1.msra.mxu0 %v588
    %622 = vmatprep.subr.mxu0 0.0
    %623 = vmatpush1.msra.mxu0 %v587
    %624 = vmatprep.subr.mxu0 0.0
    %625 = vmatpush1.msra.mxu0 %v586
    %626 = vmatprep.subr.mxu0 0.0
    %627 = vmatpush1.msra.mxu0 %v585
    %628 = vmatprep.subr.mxu0 0.0
    %629 = vmatpush1.msra.mxu0 %v584
    %630 = vmatprep.subr.mxu0 0.0
    %631 = vmatpush1.msra.mxu0 %v583
    %632 = vmatprep.subr.mxu0 0.0
    %633 = vmatpush1.msra.mxu0 %v582
    %634 = vmatprep.subr.mxu0 0.0
    %635 = vmatpush1.msra.mxu0 %v581
    %636 = vmatprep.subr.mxu0 0.0
    %637 = vmatpush2.msra.mxu0 0.0
    %638 = vmatprep.subr.mxu0 0.0
    %639 = vmatpush2.msra.mxu0 0.0
    %640 = vmatprep.subr.mxu0 0.0
    %641 = vmatpush2.msra.mxu0 0.0
    %642 = vmatprep.subr.mxu0 0.0
    %643 = vmatpush2.msra.mxu0 0.0
    %644 = vmatprep.subr.mxu0 0.0
    %645 = vmatpush2.msra.mxu0 0.0
    %646 = vmatprep.subr.mxu0 0.0
    %647 = vmatpush2.msra.mxu0 0.0
    %648 = vmatprep.subr.mxu0 0.0
    %649 = vmatpush2.msra.mxu0 0.0
    %650 = vmatprep.subr.mxu0 0.0
    %651 = vmatpush2.msra.mxu0 0.0
    %652 = vmatprep.subr.mxu0 0.0
    %653 = vmatpush2.msra.mxu0 0.0
    %654 = vmatprep.subr.mxu0 0.0
    %655 = vmatpush2.msra.mxu0 0.0
    %656 = vmatprep.subr.mxu0 0.0
    %657 = vmatpush2.msra.mxu0 0.0
    %658 = vmatprep.subr.mxu0 0.0
    %659 = vmatpush2.msra.mxu0 0.0
    %660 = vmatprep.subr.mxu0 0.0
    %661 = vmatpush2.msra.mxu0 0.0
    %662 = vmatprep.subr.mxu0 0.0
    %663 = vmatpush2.msra.mxu0 0.0
    %664 = vmatprep.subr.mxu0 0.0
    %665 = vmatpush2.msra.mxu0 0.0
    %666 = vmatprep.subr.mxu0 0.0
    %667 = vmatpush2.msra.mxu0 0.0
    %668 = vmatprep.mubr.f32.mxu0 0.0
    %669 = vmatmul.mubr.f32.gmra.mxu0 %v579
    %v670 = vpop.f32.mrf.mxu0
    %v671 = vadd.f32 %v602, %v670
    %v672 = vpop.f32.mrf.mxu0
    %673 = vmatprep.mubr.f32.mxu0 0.0
    %674 = vmatmul.mubr.f32.gmra.mxu0 %v580
    %v675 = vpop.f32.mrf.mxu0
    %v676 = vadd.f32 %v602, %v675
    %v677 = vpop.f32.mrf.mxu0
    %678 = vdwg.mxu0
    %679 = vst [vmem:[%s5] sm:$0xff] %v671
    %680 = vst [vmem:[%s5 + $0x8] sm:$0xff] %v676
    // Predicated region
    $region30: #{temporal_gnn_forward.1} parent=1 // pred_check
      _
    $region31: #{temporal_gnn_forward.1} parent=1 // pred_check_branch
      %682 = sbr.rel (0) target = $region33
    $region32: #{temporal_gnn_forward.1} parent=1 // pred_region
      _
    $region33: #{temporal_gnn_forward.1} parent=1 // pred_fallthru
      _
    // Predicated region
    $region34: #{temporal_gnn_forward.1} parent=1 // pred_check
      _
    $region35: #{temporal_gnn_forward.1} parent=1 // pred_check_branch
      %684 = sbr.rel (0) target = $region37
    $region36: #{temporal_gnn_forward.1} parent=1 // pred_region
      _
    $region37: #{temporal_gnn_forward.1} parent=1 // pred_fallthru
      _
    %685 = vsyncpa [#allocation3], 1
    %686 = vsyncpa [#allocation5], 1

</llo_original>
